<compile_context>
chip_gen: v7x
topology: tpu7x:2x2x1
jax: 0.10.0
libtpu: 0.0.40
codegen_flags: <defaults>
</compile_context>

<pallas_src>
import jax
import jax.numpy as jnp
from jax.experimental import pallas as pl
from jax.experimental.pallas import tpu as pltpu


def _pick_batch_block(n, cap=8):
    """Largest divisor of n that is <= cap (batch elements per grid step)."""
    for d in range(min(n, cap), 0, -1):
        if n % d == 0:
            return d
    return 1


def downsampler_forward(x_nchw, w_oihw, bias):
    """Conv2d(Cin->Cout, kernel=3, stride=2, padding=1, bias=True), NCHW in/out."""
    N, Cin, H, W = x_nchw.shape
    Cout = w_oihw.shape[0]
    assert w_oihw.shape == (Cout, Cin, 3, 3)
    Ho = (H - 1) // 2 + 1
    Wo = (W - 1) // 2 + 1

    # ---- wrapper-side rearrangement (one fused XLA pass over the input) ----
    # pad=1 (plus one extra zero row/col when H/W is odd so the 2x2
    # de-interleave is exact), then pack the four stride-2 phases onto the
    # channel axis, channels-last:  phase (rh, rw) lives at channel offset
    # (rh*2+rw)*Cin.  After this, every conv tap is a unit-stride slice.
    x_pad = jnp.pad(x_nchw, ((0, 0), (0, 0), (1, 1 + H % 2), (1, 1 + W % 2)))
    Hp, Wp = H + 2 + H % 2, W + 2 + W % 2
    Hh, Wh = Hp // 2, Wp // 2                      # == Ho + 1, Wo + 1
    assert Hh == Ho + 1 and Wh == Wo + 1
    x_ph = (x_pad.reshape(N, Cin, Hh, 2, Wh, 2)
            .transpose(0, 2, 4, 3, 5, 1)           # (N, Hh, Wh, rh, rw, Cin)
            .reshape(N, Hh, Wh, 4 * Cin))

    # weights folded to (Cout, 9*Cin); K ordered (kh, kw, ci) to match patches
    w2d = jnp.transpose(w_oihw, (0, 2, 3, 1)).reshape(Cout, 9 * Cin)
    b_col = bias.reshape(Cout, 1)

    B = _pick_batch_block(N)
    K = 9 * Cin

    def kernel(x_ref, w_ref, b_ref, o_ref):
        w_mat = w_ref[...]                         # (Cout, 9*Cin)
        bvec = b_ref[...].astype(jnp.float32)      # (Cout, 1)
        xall = x_ref[...]                          # (B, Hh, Wh, 4*Cin)

        # gather the 9 taps as unit-stride slices of the phase planes
        taps = []
        for kh in range(3):
            qh, rh = divmod(kh, 2)
            for kw in range(3):
                qw, rw = divmod(kw, 2)
                c0 = (rh * 2 + rw) * Cin
                taps.append(xall[:, qh:qh + Ho, qw:qw + Wo, c0:c0 + Cin])
        pcat = jnp.concatenate(taps, axis=-1)      # (B, Ho, Wo, 9*Cin)

        for b in range(B):                         # unrolled; B is small
            # single MXU matmul with the taps folded into K = 9*Cin
            p = pcat[b].reshape(Ho * Wo, K).T      # (9*Cin, Ho*Wo)
            acc = jnp.dot(w_mat, p, preferred_element_type=jnp.float32)
            # lane-dense NCHW store: lanes carry Ho*Wo, no output transpose
            o_ref[b] = (acc + bvec).astype(o_ref.dtype)

    out_flat = pl.pallas_call(
        kernel,
        out_shape=jax.ShapeDtypeStruct((N, Cout, Ho * Wo), x_nchw.dtype),
        grid=(N // B,),
        in_specs=[
            pl.BlockSpec((B, Hh, Wh, 4 * Cin), lambda i: (i, 0, 0, 0)),
            pl.BlockSpec((Cout, K), lambda i: (0, 0)),
            pl.BlockSpec((Cout, 1), lambda i: (0, 0)),
        ],
        out_specs=pl.BlockSpec((B, Cout, Ho * Wo), lambda i: (i, 0, 0)),
        compiler_params=pltpu.CompilerParams(
            dimension_semantics=("parallel",)),
    )(x_ph, w2d, b_col)

    # free reshape (row-major identity), NOT an HBM transpose
    return out_flat.reshape(N, Cout, Ho, Wo)


def _reference_conv(x_nchw, w_oihw, bias):
    out = jax.lax.conv_general_dilated(
        x_nchw, w_oihw,
        window_strides=(2, 2),
        padding=((1, 1), (1, 1)),
        dimension_numbers=("NCHW", "OIHW", "NCHW"),
    )
    return out + bias[None, :, None, None]


if __name__ == "__main__":
    key = jax.random.PRNGKey(0)
    k_x, k_w, k_b = jax.random.split(key, 3)

    N, Cin, H, W = 2, 4, 16, 16
    Cout = 8

    x = jax.random.normal(k_x, (N, Cin, H, W), dtype=jnp.float32)
    # deterministic "Conv2d" parameter init (synthetic; not a checkpoint load)
    fan_in = Cin * 3 * 3
    bound = 1.0 / (fan_in ** 0.5)
    w = jax.random.uniform(k_w, (Cout, Cin, 3, 3), jnp.float32, -bound, bound)
    b = jax.random.uniform(k_b, (Cout,), jnp.float32, -bound, bound)

    out = downsampler_forward(x, w, b)
    out = jax.block_until_ready(out)

    ref = _reference_conv(x, w, b)
    assert out.shape == (N, Cout, (H + 1) // 2, (W + 1) // 2), out.shape
    assert jnp.allclose(out, ref, atol=1e-5, rtol=1e-5), "mismatch vs reference conv"

    print("KERNEL_OK")
</pallas_src>

<mosaic_0001>
module attributes {stable_mosaic.version = 11 : i64} {
  func.func @kernel(%arg0: i32, %arg1: memref<2x9x9x16xf32, #tpu.memory_space<vmem>>, %arg2: memref<8x36xf32, #tpu.memory_space<vmem>>, %arg3: memref<8x1xf32, #tpu.memory_space<vmem>>, %arg4: memref<2x8x64xf32, #tpu.memory_space<vmem>>) attributes {dimension_semantics = [#tpu.dimension_semantics<parallel>], iteration_bounds = array<i64: 1>, scalar_prefetch = 0 : i64, scratch_operands = 0 : i64, tpu.core_type = #tpu.core_type<tc>, window_params = [{transform_indices = @transform_0, window_bounds = array<i64: 2, 9, 9, 16>}, {pipeline_mode = #tpu.pipeline_mode<synchronous>, transform_indices = @transform_1, window_bounds = array<i64: 8, 36>}, {pipeline_mode = #tpu.pipeline_mode<synchronous>, transform_indices = @transform_2, window_bounds = array<i64: 8, 1>}, {transform_indices = @transform_3, window_bounds = array<i64: 2, 8, 64>}]} {
    %c0 = arith.constant 0 : index
    %c0_0 = arith.constant 0 : index
    %0 = vector.load %arg2[%c0, %c0_0] : memref<8x36xf32, #tpu.memory_space<vmem>>, vector<8x36xf32>
    %c0_1 = arith.constant 0 : index
    %c0_2 = arith.constant 0 : index
    %1 = vector.load %arg3[%c0_1, %c0_2] : memref<8x1xf32, #tpu.memory_space<vmem>>, vector<8x1xf32>
    %c0_3 = arith.constant 0 : index
    %c0_4 = arith.constant 0 : index
    %c0_5 = arith.constant 0 : index
    %c0_6 = arith.constant 0 : index
    %2 = vector.load %arg1[%c0_3, %c0_4, %c0_5, %c0_6] : memref<2x9x9x16xf32, #tpu.memory_space<vmem>>, vector<2x9x9x16xf32>
    %3 = vector.extract_strided_slice %2 {offsets = [0, 0, 0, 0], sizes = [2, 8, 8, 4], strides = [1, 1, 1, 1]} : vector<2x9x9x16xf32> to vector<2x8x8x4xf32>
    %4 = vector.extract_strided_slice %2 {offsets = [0, 0, 0, 4], sizes = [2, 8, 8, 4], strides = [1, 1, 1, 1]} : vector<2x9x9x16xf32> to vector<2x8x8x4xf32>
    %5 = vector.extract_strided_slice %2 {offsets = [0, 0, 1, 0], sizes = [2, 8, 8, 4], strides = [1, 1, 1, 1]} : vector<2x9x9x16xf32> to vector<2x8x8x4xf32>
    %6 = vector.extract_strided_slice %2 {offsets = [0, 0, 0, 8], sizes = [2, 8, 8, 4], strides = [1, 1, 1, 1]} : vector<2x9x9x16xf32> to vector<2x8x8x4xf32>
    %7 = vector.extract_strided_slice %2 {offsets = [0, 0, 0, 12], sizes = [2, 8, 8, 4], strides = [1, 1, 1, 1]} : vector<2x9x9x16xf32> to vector<2x8x8x4xf32>
    %8 = vector.extract_strided_slice %2 {offsets = [0, 0, 1, 8], sizes = [2, 8, 8, 4], strides = [1, 1, 1, 1]} : vector<2x9x9x16xf32> to vector<2x8x8x4xf32>
    %9 = vector.extract_strided_slice %2 {offsets = [0, 1, 0, 0], sizes = [2, 8, 8, 4], strides = [1, 1, 1, 1]} : vector<2x9x9x16xf32> to vector<2x8x8x4xf32>
    %10 = vector.extract_strided_slice %2 {offsets = [0, 1, 0, 4], sizes = [2, 8, 8, 4], strides = [1, 1, 1, 1]} : vector<2x9x9x16xf32> to vector<2x8x8x4xf32>
    %11 = vector.extract_strided_slice %2 {offsets = [0, 1, 1, 0], sizes = [2, 8, 8, 4], strides = [1, 1, 1, 1]} : vector<2x9x9x16xf32> to vector<2x8x8x4xf32>
    %12 = tpu.concatenate %3, %4, %5, %6, %7, %8, %9, %10, %11 in 3 : vector<2x8x8x4xf32>, vector<2x8x8x4xf32>, vector<2x8x8x4xf32>, vector<2x8x8x4xf32>, vector<2x8x8x4xf32>, vector<2x8x8x4xf32>, vector<2x8x8x4xf32>, vector<2x8x8x4xf32>, vector<2x8x8x4xf32> -> vector<2x8x8x36xf32>
    %13 = vector.extract_strided_slice %12 {offsets = [0, 0, 0, 0], sizes = [1, 8, 8, 36], strides = [1, 1, 1, 1]} : vector<2x8x8x36xf32> to vector<1x8x8x36xf32>
    %14 = vector.shape_cast %13 : vector<1x8x8x36xf32> to vector<8x8x36xf32>
    %15 = vector.shape_cast %14 : vector<8x8x36xf32> to vector<64x36xf32>
    %16 = tpu.transpose %15, [1, 0] : vector<64x36xf32> -> vector<36x64xf32>
    %cst = arith.constant dense<0.000000e+00> : vector<8x64xf32>
    %17 = tpu.matmul %0, %16, %cst {dimension_numbers = #tpu.dot_dimension_numbers<[1], [0], [0], [1], [0, 0, 1, 1], [], []>} : vector<8x36xf32>, vector<36x64xf32>, vector<8x64xf32> -> vector<8x64xf32>
    %18 = vector.broadcast %1 : vector<8x1xf32> to vector<8x64xf32>
    %19 = arith.addf %17, %18 : vector<8x64xf32>
    %c0_7 = arith.constant 0 : index
    %c0_8 = arith.constant 0 : index
    %c0_9 = arith.constant 0 : index
    %20 = vector.load %arg4[%c0_7, %c0_8, %c0_9] : memref<2x8x64xf32, #tpu.memory_space<vmem>>, vector<1x8x64xf32>
    %21 = vector.shape_cast %20 : vector<1x8x64xf32> to vector<8x64xf32>
    %22 = vector.shape_cast %19 : vector<8x64xf32> to vector<1x8x64xf32>
    tpu.vector_store %arg4[%c0_7, %c0_8, %c0_9], %22 {strides = array<i32>} : memref<2x8x64xf32, #tpu.memory_space<vmem>>, vector<1x8x64xf32>,
    %23 = vector.extract_strided_slice %12 {offsets = [1, 0, 0, 0], sizes = [1, 8, 8, 36], strides = [1, 1, 1, 1]} : vector<2x8x8x36xf32> to vector<1x8x8x36xf32>
    %24 = vector.shape_cast %23 : vector<1x8x8x36xf32> to vector<8x8x36xf32>
    %25 = vector.shape_cast %24 : vector<8x8x36xf32> to vector<64x36xf32>
    %26 = tpu.transpose %25, [1, 0] : vector<64x36xf32> -> vector<36x64xf32>
    %cst_10 = arith.constant dense<0.000000e+00> : vector<8x64xf32>
    %27 = tpu.matmul %0, %26, %cst_10 {dimension_numbers = #tpu.dot_dimension_numbers<[1], [0], [0], [1], [0, 0, 1, 1], [], []>} : vector<8x36xf32>, vector<36x64xf32>, vector<8x64xf32> -> vector<8x64xf32>
    %28 = vector.broadcast %1 : vector<8x1xf32> to vector<8x64xf32>
    %29 = arith.addf %27, %28 : vector<8x64xf32>
    %c1 = arith.constant 1 : index
    %c0_11 = arith.constant 0 : index
    %c0_12 = arith.constant 0 : index
    %30 = vector.load %arg4[%c1, %c0_11, %c0_12] : memref<2x8x64xf32, #tpu.memory_space<vmem>>, vector<1x8x64xf32>
    %31 = vector.shape_cast %30 : vector<1x8x64xf32> to vector<8x64xf32>
    %32 = vector.shape_cast %29 : vector<8x64xf32> to vector<1x8x64xf32>
    tpu.vector_store %arg4[%c1, %c0_11, %c0_12], %32 {strides = array<i32>} : memref<2x8x64xf32, #tpu.memory_space<vmem>>, vector<1x8x64xf32>,
    return
  }
  func.func @transform_0(%arg0: i32) -> (i32, i32, i32, i32) {
    %c0_i32 = arith.constant 0 : i32
    %c0_i32_0 = arith.constant 0 : i32
    %c0_i32_1 = arith.constant 0 : i32
    %c0_i32_2 = arith.constant 0 : i32
    return %arg0, %c0_i32, %c0_i32_0, %c0_i32_1 : i32, i32, i32, i32
  }
  func.func @transform_1(%arg0: i32) -> (i32, i32) {
    %c0_i32 = arith.constant 0 : i32
    %c0_i32_0 = arith.constant 0 : i32
    %c0_i32_1 = arith.constant 0 : i32
    return %c0_i32, %c0_i32_0 : i32, i32
  }
  func.func @transform_2(%arg0: i32) -> (i32, i32) {
    %c0_i32 = arith.constant 0 : i32
    %c0_i32_0 = arith.constant 0 : i32
    %c0_i32_1 = arith.constant 0 : i32
    return %c0_i32, %c0_i32_0 : i32, i32
  }
  func.func @transform_3(%arg0: i32) -> (i32, i32, i32) {
    %c0_i32 = arith.constant 0 : i32
    %c0_i32_0 = arith.constant 0 : i32
    %c0_i32_1 = arith.constant 0 : i32
    return %arg0, %c0_i32, %c0_i32_0 : i32, i32, i32
  }
}

</mosaic_0001>

<llo_original>
// kernel: tpu_custom_call.1
$region0: #{tpu_custom_call.1}
  #allocation0 [shape = 'u32[]', space=smem, size = 0x4, offset = 0x4, fixed_abs, tag = 'smem constant byte address 0x4 - core index']
  #allocation1 [shape = 'u32[144,128]{1,0:T(1,128)}', space=vmem, size = 0x12000, scoped, tag = 'internal scratch']
  %s0 = inlined_call_operand.vmem [shape: f32[2,9,9,16], index: 0, kind: input, shape index: {}]
  %s1 = inlined_call_operand.vmem [shape: f32[8,36], index: 1, kind: input, shape index: {}]
  %s2 = inlined_call_operand.vmem [shape: f32[8,1], index: 2, kind: input, shape index: {}]
  %s3 = inlined_call_operand.hbm [shape: f32[2,8,64], index: 3, kind: output, shape index: {}]
  %s4 = sld [smem:[#allocation0]]
  $region22: #{tpu_custom_call.1} parent=0
    _
  %s6 = ssub.s32 1, %s4
  %s7 = scalar_select 0, %s6, %s4
  $region1: #{tpu_custom_call.1} parent=0
    #allocation2 [shape = 'u8[8192]{0}', space=vmem, size = 0x2000, scoped, tag = 'output window, operand 0, single buffered']
    #allocation3 [shape = 's32[1]{0}', space=sflag, size = 0x4, scoped, tag = 'scoped memory for tpu_custom_call.1']
    %8 = vsyncpa [#allocation3], 0
    // Predicated region
    $region2: #{tpu_custom_call.1} parent=1 // pred_check
      _
    $region3: #{tpu_custom_call.1} parent=1 // pred_check_branch
      %10 = sbr.rel (0) target = $region5
    $region4: #{tpu_custom_call.1} parent=1 // pred_region
      _
    $region5: #{tpu_custom_call.1} parent=1 // pred_fallthru
      _
    // Predicated region
    $region6: #{tpu_custom_call.1} parent=1 // pred_check
      _
    $region7: #{tpu_custom_call.1} parent=1 // pred_check_branch
      %12 = sbr.rel (0) target = $region9
    $region8: #{tpu_custom_call.1} parent=1 // pred_region
      _
    $region9: #{tpu_custom_call.1} parent=1 // pred_fallthru
      _
    // Predicated region
    $region10: #{tpu_custom_call.1} parent=1 // pred_check
      _
    $region11: #{tpu_custom_call.1} parent=1 // pred_check_branch
      %14 = sbr.rel (0) target = $region13
    $region12: #{tpu_custom_call.1} parent=1 // pred_region
      _
    $region13: #{tpu_custom_call.1} parent=1 // pred_fallthru
      _
    %v15 = vld [vmem:[%s1] sm:$0xff]
    %v16 = vld [vmem:[%s2] sm:$0xff]
    %v17 = vld [vmem:[%s0] sm:$0xff]
    %v18 = vld [vmem:[%s0 + $0x8] sm:$0x1]
    %v19 = vld [vmem:[%s0 + $0x10] sm:$0xff]
    %v20 = vld [vmem:[%s0 + $0x18] sm:$0x1]
    %v21 = vld [vmem:[%s0 + $0x20] sm:$0xff]
    %v22 = vld [vmem:[%s0 + $0x28] sm:$0x1]
    %v23 = vld [vmem:[%s0 + $0x30] sm:$0xff]
    %v24 = vld [vmem:[%s0 + $0x38] sm:$0x1]
    %v25 = vld [vmem:[%s0 + $0x40] sm:$0xff]
    %v26 = vld [vmem:[%s0 + $0x48] sm:$0x1]
    %v27 = vld [vmem:[%s0 + $0x50] sm:$0xff]
    %v28 = vld [vmem:[%s0 + $0x58] sm:$0x1]
    %v29 = vld [vmem:[%s0 + $0x60] sm:$0xff]
    %v30 = vld [vmem:[%s0 + $0x68] sm:$0x1]
    %v31 = vld [vmem:[%s0 + $0x70] sm:$0xff]
    %v32 = vld [vmem:[%s0 + $0x78] sm:$0x1]
    %v33 = vld [vmem:[%s0 + $0x80] sm:$0xff]
    %v34 = vld [vmem:[%s0 + $0x88] sm:$0x1]
    %v35 = vld [vmem:[%s0 + $0x90] sm:$0xff]
    %v36 = vld [vmem:[%s0 + $0x98] sm:$0x1]
    %v37 = vld [vmem:[%s0 + $0xa0] sm:$0xff]
    %v38 = vld [vmem:[%s0 + $0xa8] sm:$0x1]
    %v39 = vld [vmem:[%s0 + $0xb0] sm:$0xff]
    %v40 = vld [vmem:[%s0 + $0xb8] sm:$0x1]
    %v41 = vld [vmem:[%s0 + $0xc0] sm:$0xff]
    %v42 = vld [vmem:[%s0 + $0xc8] sm:$0x1]
    %v43 = vld [vmem:[%s0 + $0xd0] sm:$0xff]
    %v44 = vld [vmem:[%s0 + $0xd8] sm:$0x1]
    %v45 = vld [vmem:[%s0 + $0xe0] sm:$0xff]
    %v46 = vld [vmem:[%s0 + $0xe8] sm:$0x1]
    %v47 = vld [vmem:[%s0 + $0xf0] sm:$0xff]
    %v48 = vld [vmem:[%s0 + $0xf8] sm:$0x1]
    %v49 = vld [vmem:[%s0 + $0x100] sm:$0xff]
    %v50 = vld [vmem:[%s0 + $0x108] sm:$0x1]
    %v51 = vld [vmem:[%s0 + $0x110] sm:$0xff]
    %v52 = vld [vmem:[%s0 + $0x118] sm:$0x1]
    %vm85 = vcmask 1046528
    %v86 = vrot.slane %v17, 1
    %v87 = vrot.slane %v18, 1
    %v88 = vsel %vm85, %v86, %v87
    %v89 = vrot.slane %v19, 1
    %v90 = vrot.slane %v20, 1
    %v91 = vsel %vm85, %v89, %v90
    %v92 = vrot.slane %v21, 1
    %v93 = vrot.slane %v22, 1
    %v94 = vsel %vm85, %v92, %v93
    %v95 = vrot.slane %v23, 1
    %v96 = vrot.slane %v24, 1
    %v97 = vsel %vm85, %v95, %v96
    %v98 = vrot.slane %v25, 1
    %v99 = vrot.slane %v26, 1
    %v100 = vsel %vm85, %v98, %v99
    %v101 = vrot.slane %v27, 1
    %v102 = vrot.slane %v28, 1
    %v103 = vsel %vm85, %v101, %v102
    %v104 = vrot.slane %v29, 1
    %v105 = vrot.slane %v30, 1
    %v106 = vsel %vm85, %v104, %v105
    %v107 = vrot.slane %v31, 1
    %v108 = vrot.slane %v32, 1
    %v109 = vsel %vm85, %v107, %v108
    %v110 = vrot.slane %v35, 1
    %v111 = vrot.slane %v36, 1
    %v112 = vsel %vm85, %v110, %v111
    %v113 = vrot.slane %v37, 1
    %v114 = vrot.slane %v38, 1
    %v115 = vsel %vm85, %v113, %v114
    %v116 = vrot.slane %v39, 1
    %v117 = vrot.slane %v40, 1
    %v118 = vsel %vm85, %v116, %v117
    %v119 = vrot.slane %v41, 1
    %v120 = vrot.slane %v42, 1
    %v121 = vsel %vm85, %v119, %v120
    %v122 = vrot.slane %v43, 1
    %v123 = vrot.slane %v44, 1
    %v124 = vsel %vm85, %v122, %v123
    %v125 = vrot.slane %v45, 1
    %v126 = vrot.slane %v46, 1
    %v127 = vsel %vm85, %v125, %v126
    %v128 = vrot.slane %v47, 1
    %v129 = vrot.slane %v48, 1
    %v130 = vsel %vm85, %v128, %v129
    %v131 = vrot.slane %v49, 1
    %v132 = vrot.slane %v50, 1
    %v133 = vsel %vm85, %v131, %v132
    %134 = vrot.lane.b32.xlu0 %v88, 8
    %v135 = vpop.permute.xlu0 %134
    %136 = vrot.lane.b32.xlu0 %v91, 8
    %v137 = vpop.permute.xlu0 %136
    %138 = vrot.lane.b32.xlu0 %v94, 8
    %v139 = vpop.permute.xlu0 %138
    %140 = vrot.lane.b32.xlu0 %v97, 8
    %v141 = vpop.permute.xlu0 %140
    %142 = vrot.lane.b32.xlu0 %v100, 8
    %v143 = vpop.permute.xlu0 %142
    %144 = vrot.lane.b32.xlu0 %v103, 8
    %v145 = vpop.permute.xlu0 %144
    %146 = vrot.lane.b32.xlu0 %v106, 8
    %v147 = vpop.permute.xlu0 %146
    %148 = vrot.lane.b32.xlu0 %v109, 8
    %v149 = vpop.permute.xlu0 %148
    %150 = vrot.lane.b32.xlu0 %v112, 8
    %v151 = vpop.permute.xlu0 %150
    %152 = vrot.lane.b32.xlu0 %v115, 8
    %v153 = vpop.permute.xlu0 %152
    %154 = vrot.lane.b32.xlu0 %v118, 8
    %v155 = vpop.permute.xlu0 %154
    %156 = vrot.lane.b32.xlu0 %v121, 8
    %v157 = vpop.permute.xlu0 %156
    %158 = vrot.lane.b32.xlu0 %v124, 8
    %v159 = vpop.permute.xlu0 %158
    %160 = vrot.lane.b32.xlu0 %v127, 8
    %v161 = vpop.permute.xlu0 %160
    %162 = vrot.lane.b32.xlu0 %v130, 8
    %v163 = vpop.permute.xlu0 %162
    %164 = vrot.lane.b32.xlu0 %v133, 8
    %v165 = vpop.permute.xlu0 %164
    %182 = vrot.lane.b32.xlu0 %v17, 4
    %v183 = vpop.permute.xlu0 %182
    %184 = vrot.lane.b32.xlu0 %v19, 4
    %v185 = vpop.permute.xlu0 %184
    %186 = vrot.lane.b32.xlu0 %v21, 4
    %v187 = vpop.permute.xlu0 %186
    %188 = vrot.lane.b32.xlu0 %v23, 4
    %v189 = vpop.permute.xlu0 %188
    %190 = vrot.lane.b32.xlu0 %v25, 4
    %v191 = vpop.permute.xlu0 %190
    %192 = vrot.lane.b32.xlu0 %v27, 4
    %v193 = vpop.permute.xlu0 %192
    %194 = vrot.lane.b32.xlu0 %v29, 4
    %v195 = vpop.permute.xlu0 %194
    %196 = vrot.lane.b32.xlu0 %v31, 4
    %v197 = vpop.permute.xlu0 %196
    %198 = vrot.lane.b32.xlu0 %v35, 4
    %v199 = vpop.permute.xlu0 %198
    %200 = vrot.lane.b32.xlu0 %v37, 4
    %v201 = vpop.permute.xlu0 %200
    %202 = vrot.lane.b32.xlu0 %v39, 4
    %v203 = vpop.permute.xlu0 %202
    %204 = vrot.lane.b32.xlu0 %v41, 4
    %v205 = vpop.permute.xlu0 %204
    %206 = vrot.lane.b32.xlu0 %v43, 4
    %v207 = vpop.permute.xlu0 %206
    %208 = vrot.lane.b32.xlu0 %v45, 4
    %v209 = vpop.permute.xlu0 %208
    %210 = vrot.lane.b32.xlu0 %v47, 4
    %v211 = vpop.permute.xlu0 %210
    %212 = vrot.lane.b32.xlu0 %v49, 4
    %v213 = vpop.permute.xlu0 %212
    %230 = vrot.lane.b32.xlu0 %v88, 12
    %v231 = vpop.permute.xlu0 %230
    %232 = vrot.lane.b32.xlu0 %v91, 12
    %v233 = vpop.permute.xlu0 %232
    %234 = vrot.lane.b32.xlu0 %v94, 12
    %v235 = vpop.permute.xlu0 %234
    %236 = vrot.lane.b32.xlu0 %v97, 12
    %v237 = vpop.permute.xlu0 %236
    %238 = vrot.lane.b32.xlu0 %v100, 12
    %v239 = vpop.permute.xlu0 %238
    %240 = vrot.lane.b32.xlu0 %v103, 12
    %v241 = vpop.permute.xlu0 %240
    %242 = vrot.lane.b32.xlu0 %v106, 12
    %v243 = vpop.permute.xlu0 %242
    %244 = vrot.lane.b32.xlu0 %v109, 12
    %v245 = vpop.permute.xlu0 %244
    %246 = vrot.lane.b32.xlu0 %v112, 12
    %v247 = vpop.permute.xlu0 %246
    %248 = vrot.lane.b32.xlu0 %v115, 12
    %v249 = vpop.permute.xlu0 %248
    %250 = vrot.lane.b32.xlu0 %v118, 12
    %v251 = vpop.permute.xlu0 %250
    %252 = vrot.lane.b32.xlu0 %v121, 12
    %v253 = vpop.permute.xlu0 %252
    %254 = vrot.lane.b32.xlu0 %v124, 12
    %v255 = vpop.permute.xlu0 %254
    %256 = vrot.lane.b32.xlu0 %v127, 12
    %v257 = vpop.permute.xlu0 %256
    %258 = vrot.lane.b32.xlu0 %v130, 12
    %v259 = vpop.permute.xlu0 %258
    %260 = vrot.lane.b32.xlu0 %v133, 12
    %v261 = vpop.permute.xlu0 %260
    %280 = vrot.lane.b32.xlu0 %v19, 24
    %v281 = vpop.permute.xlu0 %280
    %282 = vrot.lane.b32.xlu0 %v21, 24
    %v283 = vpop.permute.xlu0 %282
    %284 = vrot.lane.b32.xlu0 %v23, 24
    %v285 = vpop.permute.xlu0 %284
    %286 = vrot.lane.b32.xlu0 %v25, 24
    %v287 = vpop.permute.xlu0 %286
    %288 = vrot.lane.b32.xlu0 %v27, 24
    %v289 = vpop.permute.xlu0 %288
    %290 = vrot.lane.b32.xlu0 %v29, 24
    %v291 = vpop.permute.xlu0 %290
    %292 = vrot.lane.b32.xlu0 %v31, 24
    %v293 = vpop.permute.xlu0 %292
    %294 = vrot.lane.b32.xlu0 %v33, 24
    %v295 = vpop.permute.xlu0 %294
    %296 = vrot.lane.b32.xlu0 %v37, 24
    %v297 = vpop.permute.xlu0 %296
    %298 = vrot.lane.b32.xlu0 %v39, 24
    %v299 = vpop.permute.xlu0 %298
    %300 = vrot.lane.b32.xlu0 %v41, 24
    %v301 = vpop.permute.xlu0 %300
    %302 = vrot.lane.b32.xlu0 %v43, 24
    %v303 = vpop.permute.xlu0 %302
    %304 = vrot.lane.b32.xlu0 %v45, 24
    %v305 = vpop.permute.xlu0 %304
    %306 = vrot.lane.b32.xlu0 %v47, 24
    %v307 = vpop.permute.xlu0 %306
    %308 = vrot.lane.b32.xlu0 %v49, 24
    %v309 = vpop.permute.xlu0 %308
    %310 = vrot.lane.b32.xlu0 %v51, 24
    %v311 = vpop.permute.xlu0 %310
    %v330 = vrot.slane %v33, 1
    %v331 = vrot.slane %v34, 1
    %v332 = vsel %vm85, %v330, %v331
    %v333 = vrot.slane %v51, 1
    %v334 = vrot.slane %v52, 1
    %v335 = vsel %vm85, %v333, %v334
    %336 = vrot.lane.b32.xlu0 %v91, 32
    %v337 = vpop.permute.xlu0 %336
    %338 = vrot.lane.b32.xlu0 %v94, 32
    %v339 = vpop.permute.xlu0 %338
    %340 = vrot.lane.b32.xlu0 %v97, 32
    %v341 = vpop.permute.xlu0 %340
    %342 = vrot.lane.b32.xlu0 %v100, 32
    %v343 = vpop.permute.xlu0 %342
    %344 = vrot.lane.b32.xlu0 %v103, 32
    %v345 = vpop.permute.xlu0 %344
    %346 = vrot.lane.b32.xlu0 %v106, 32
    %v347 = vpop.permute.xlu0 %346
    %348 = vrot.lane.b32.xlu0 %v109, 32
    %v349 = vpop.permute.xlu0 %348
    %350 = vrot.lane.b32.xlu0 %v332, 32
    %v351 = vpop.permute.xlu0 %350
    %352 = vrot.lane.b32.xlu0 %v115, 32
    %v353 = vpop.permute.xlu0 %352
    %354 = vrot.lane.b32.xlu0 %v118, 32
    %v355 = vpop.permute.xlu0 %354
    %356 = vrot.lane.b32.xlu0 %v121, 32
    %v357 = vpop.permute.xlu0 %356
    %358 = vrot.lane.b32.xlu0 %v124, 32
    %v359 = vpop.permute.xlu0 %358
    %360 = vrot.lane.b32.xlu0 %v127, 32
    %v361 = vpop.permute.xlu0 %360
    %362 = vrot.lane.b32.xlu0 %v130, 32
    %v363 = vpop.permute.xlu0 %362
    %364 = vrot.lane.b32.xlu0 %v133, 32
    %v365 = vpop.permute.xlu0 %364
    %366 = vrot.lane.b32.xlu0 %v335, 32
    %v367 = vpop.permute.xlu0 %366
    %vm384 = vcmask 64512
    %v385 = vsel %vm384, %v17, %v135
    %v386 = vsel %vm384, %v19, %v137
    %v387 = vsel %vm384, %v21, %v139
    %v388 = vsel %vm384, %v23, %v141
    %v389 = vsel %vm384, %v25, %v143
    %v390 = vsel %vm384, %v27, %v145
    %v391 = vsel %vm384, %v29, %v147
    %v392 = vsel %vm384, %v31, %v149
    %v393 = vsel %vm384, %v35, %v151
    %v394 = vsel %vm384, %v37, %v153
    %v395 = vsel %vm384, %v39, %v155
    %v396 = vsel %vm384, %v41, %v157
    %v397 = vsel %vm384, %v43, %v159
    %v398 = vsel %vm384, %v45, %v161
    %v399 = vsel %vm384, %v47, %v163
    %v400 = vsel %vm384, %v49, %v165
    %vm401 = vcmask 97280
    %v402 = vsel %vm401, %v385, %v183
    %v403 = vsel %vm401, %v386, %v185
    %v404 = vsel %vm401, %v387, %v187
    %v405 = vsel %vm401, %v388, %v189
    %v406 = vsel %vm401, %v389, %v191
    %v407 = vsel %vm401, %v390, %v193
    %v408 = vsel %vm401, %v391, %v195
    %v409 = vsel %vm401, %v392, %v197
    %v410 = vsel %vm401, %v393, %v199
    %v411 = vsel %vm401, %v394, %v201
    %v412 = vsel %vm401, %v395, %v203
    %v413 = vsel %vm401, %v396, %v205
    %v414 = vsel %vm401, %v397, %v207
    %v415 = vsel %vm401, %v398, %v209
    %v416 = vsel %vm401, %v399, %v211
    %v417 = vsel %vm401, %v400, %v213
    %vm418 = vcmask 130048
    %v419 = vsel %vm418, %v402, %v183
    %v420 = vsel %vm418, %v403, %v185
    %v421 = vsel %vm418, %v404, %v187
    %v422 = vsel %vm418, %v405, %v189
    %v423 = vsel %vm418, %v406, %v191
    %v424 = vsel %vm418, %v407, %v193
    %v425 = vsel %vm418, %v408, %v195
    %v426 = vsel %vm418, %v409, %v197
    %v427 = vsel %vm418, %v410, %v199
    %v428 = vsel %vm418, %v411, %v201
    %v429 = vsel %vm418, %v412, %v203
    %v430 = vsel %vm418, %v413, %v205
    %v431 = vsel %vm418, %v414, %v207
    %v432 = vsel %vm418, %v415, %v209
    %v433 = vsel %vm418, %v416, %v211
    %v434 = vsel %vm418, %v417, %v213
    %vm435 = vcmask 162816
    %v436 = vsel %vm435, %v419, %v231
    %v437 = vsel %vm435, %v420, %v233
    %v438 = vsel %vm435, %v421, %v235
    %v439 = vsel %vm435, %v422, %v237
    %v440 = vsel %vm435, %v423, %v239
    %v441 = vsel %vm435, %v424, %v241
    %v442 = vsel %vm435, %v425, %v243
    %v443 = vsel %vm435, %v426, %v245
    %v444 = vsel %vm435, %v427, %v247
    %v445 = vsel %vm435, %v428, %v249
    %v446 = vsel %vm435, %v429, %v251
    %v447 = vsel %vm435, %v430, %v253
    %v448 = vsel %vm435, %v431, %v255
    %v449 = vsel %vm435, %v432, %v257
    %v450 = vsel %vm435, %v433, %v259
    %v451 = vsel %vm435, %v434, %v261
    %vm452 = vcmask 195584
    %v453 = vsel %vm452, %v436, %v281
    %v454 = vsel %vm452, %v437, %v283
    %v455 = vsel %vm452, %v438, %v285
    %v456 = vsel %vm452, %v439, %v287
    %v457 = vsel %vm452, %v440, %v289
    %v458 = vsel %vm452, %v441, %v291
    %v459 = vsel %vm452, %v442, %v293
    %v460 = vsel %vm452, %v443, %v295
    %v461 = vsel %vm452, %v444, %v297
    %v462 = vsel %vm452, %v445, %v299
    %v463 = vsel %vm452, %v446, %v301
    %v464 = vsel %vm452, %v447, %v303
    %v465 = vsel %vm452, %v448, %v305
    %v466 = vsel %vm452, %v449, %v307
    %v467 = vsel %vm452, %v450, %v309
    %v468 = vsel %vm452, %v451, %v311
    %vm469 = vcmask 228352
    %v470 = vsel %vm469, %v453, %v281
    %v471 = vsel %vm469, %v454, %v283
    %v472 = vsel %vm469, %v455, %v285
    %v473 = vsel %vm469, %v456, %v287
    %v474 = vsel %vm469, %v457, %v289
    %v475 = vsel %vm469, %v458, %v291
    %v476 = vsel %vm469, %v459, %v293
    %v477 = vsel %vm469, %v460, %v295
    %v478 = vsel %vm469, %v461, %v297
    %v479 = vsel %vm469, %v462, %v299
    %v480 = vsel %vm469, %v463, %v301
    %v481 = vsel %vm469, %v464, %v303
    %v482 = vsel %vm469, %v465, %v305
    %v483 = vsel %vm469, %v466, %v307
    %v484 = vsel %vm469, %v467, %v309
    %v485 = vsel %vm469, %v468, %v311
    %vm486 = vcmask 261120
    %v487 = vsel %vm486, %v470, %v337
    %v488 = vsel %vm486, %v471, %v339
    %v489 = vsel %vm486, %v472, %v341
    %v490 = vsel %vm486, %v473, %v343
    %v491 = vsel %vm486, %v474, %v345
    %v492 = vsel %vm486, %v475, %v347
    %v493 = vsel %vm486, %v476, %v349
    %v494 = vsel %vm486, %v477, %v351
    %v495 = vsel %vm486, %v478, %v353
    %v496 = vsel %vm486, %v479, %v355
    %v497 = vsel %vm486, %v480, %v357
    %v498 = vsel %vm486, %v481, %v359
    %v499 = vsel %vm486, %v482, %v361
    %v500 = vsel %vm486, %v483, %v363
    %v501 = vsel %vm486, %v484, %v365
    %v502 = vsel %vm486, %v485, %v367
    %504 = vset.pattern.permute.xlu0 0
    %505 = vperm.xlu0 %504, %v16
    %v506 = vpop.permute.xlu0 %505
    %vm508 = vcmask 293888
    %v510 = vsel %vm508, %v15, 0
    %v513 = vsel %vm508, %v487, 0
    %v516 = vsel %vm508, %v488, 0
    %v519 = vsel %vm508, %v489, 0
    %v522 = vsel %vm508, %v490, 0
    %v525 = vsel %vm508, %v491, 0
    %v528 = vsel %vm508, %v492, 0
    %v531 = vsel %vm508, %v493, 0
    %v534 = vsel %vm508, %v494, 0
    %536 = vmatprep.subr.mxu0 0.0
    %537 = vmatpush1.xpose.msra.mxu0 %v513
    %538 = vmatprep.subr.mxu0 0.0
    %539 = vmatpush1.xpose.msra.mxu0 %v516
    %540 = vmatprep.subr.mxu0 0.0
    %541 = vmatpush1.xpose.msra.mxu0 %v519
    %542 = vmatprep.subr.mxu0 0.0
    %543 = vmatpush1.xpose.msra.mxu0 %v522
    %544 = vmatprep.subr.mxu0 0.0
    %545 = vmatpush1.xpose.msra.mxu0 %v525
    %546 = vmatprep.subr.mxu0 0.0
    %547 = vmatpush1.xpose.msra.mxu0 %v528
    %548 = vmatprep.subr.mxu0 0.0
    %549 = vmatpush1.xpose.msra.mxu0 %v531
    %550 = vmatprep.subr.mxu0 0.0
    %551 = vmatpush1.xpose.msra.mxu0 %v534
    %552 = vmatprep.subr.mxu0 0.0
    %553 = vmatpush1.xpose.msra.mxu0 0.0
    %554 = vmatprep.subr.mxu0 0.0
    %555 = vmatpush1.xpose.msra.mxu0 0.0
    %556 = vmatprep.subr.mxu0 0.0
    %557 = vmatpush1.xpose.msra.mxu0 0.0
    %558 = vmatprep.subr.mxu0 0.0
    %559 = vmatpush1.xpose.msra.mxu0 0.0
    %560 = vmatprep.subr.mxu0 0.0
    %561 = vmatpush1.xpose.msra.mxu0 0.0
    %562 = vmatprep.subr.mxu0 0.0
    %563 = vmatpush1.xpose.msra.mxu0 0.0
    %564 = vmatprep.subr.mxu0 0.0
    %565 = vmatpush1.xpose.msra.mxu0 0.0
    %566 = vmatprep.subr.mxu0 0.0
    %567 = vmatpush1.xpose.msra.mxu0 0.0
    %568 = vmatprep.subr.mxu0 0.0
    %569 = vmatpush1.xpose.msra.mxu0 0.0
    %570 = vmatprep.subr.mxu0 0.0
    %571 = vmatpush1.xpose.msra.mxu0 0.0
    %572 = vmatprep.subr.mxu0 0.0
    %573 = vmatpush1.xpose.msra.mxu0 0.0
    %574 = vmatprep.subr.mxu0 0.0
    %575 = vmatpush1.xpose.msra.mxu0 0.0
    %576 = vmatprep.subr.mxu0 0.0
    %577 = vmatpush1.xpose.msra.mxu0 0.0
    %578 = vmatprep.subr.mxu0 0.0
    %579 = vmatpush1.xpose.msra.mxu0 0.0
    %580 = vmatprep.subr.mxu0 0.0
    %581 = vmatpush1.xpose.msra.mxu0 0.0
    %582 = vmatprep.subr.mxu0 0.0
    %583 = vmatpush1.xpose.msra.mxu0 0.0
    %584 = vmatprep.subr.mxu0 0.0
    %585 = vmatpush1.xpose.msra.mxu0 0.0
    %586 = vmatprep.subr.mxu0 0.0
    %587 = vmatpush1.xpose.msra.mxu0 0.0
    %588 = vmatprep.subr.mxu0 0.0
    %589 = vmatpush1.xpose.msra.mxu0 0.0
    %590 = vmatprep.subr.mxu0 0.0
    %591 = vmatpush1.xpose.msra.mxu0 0.0
    %592 = vmatprep.subr.mxu0 0.0
    %593 = vmatpush1.xpose.msra.mxu0 0.0
    %594 = vmatprep.subr.mxu0 0.0
    %595 = vmatpush1.xpose.msra.mxu0 0.0
    %596 = vmatprep.subr.mxu0 0.0
    %597 = vmatpush1.xpose.msra.mxu0 0.0
    %598 = vmatprep.subr.mxu0 0.0
    %599 = vmatpush1.xpose.msra.mxu0 0.0
    %600 = vmatprep.mubr.f32.mxu0 0.0
    %601 = vmatmul.mubr.f32.gmra.mrb[0].mxu0 %v510
    %v602 = vpop.f32.mrb[0].mxu0
    %v603 = vadd.f32 %v506, %v602
    %v604 = vpop.f32.mrb[0].mxu0
    %605 = vdwg.mxu0
    %vm606 = vcmask 523264
    %607 = vst.msk [vmem:[#allocation2] sm:$0xff] %vm606, %v603
    %v609 = vsel %vm508, %v495, 0
    %v612 = vsel %vm508, %v496, 0
    %v615 = vsel %vm508, %v497, 0
    %v618 = vsel %vm508, %v498, 0
    %v621 = vsel %vm508, %v499, 0
    %v624 = vsel %vm508, %v500, 0
    %v627 = vsel %vm508, %v501, 0
    %v630 = vsel %vm508, %v502, 0
    %632 = vmatprep.subr.mxu0 0.0
    %633 = vmatpush1.xpose.msra.mxu0 %v609
    %634 = vmatprep.subr.mxu0 0.0
    %635 = vmatpush1.xpose.msra.mxu0 %v612
    %636 = vmatprep.subr.mxu0 0.0
    %637 = vmatpush1.xpose.msra.mxu0 %v615
    %638 = vmatprep.subr.mxu0 0.0
    %639 = vmatpush1.xpose.msra.mxu0 %v618
    %640 = vmatprep.subr.mxu0 0.0
    %641 = vmatpush1.xpose.msra.mxu0 %v621
    %642 = vmatprep.subr.mxu0 0.0
    %643 = vmatpush1.xpose.msra.mxu0 %v624
    %644 = vmatprep.subr.mxu0 0.0
    %645 = vmatpush1.xpose.msra.mxu0 %v627
    %646 = vmatprep.subr.mxu0 0.0
    %647 = vmatpush1.xpose.msra.mxu0 %v630
    %648 = vmatprep.subr.mxu0 0.0
    %649 = vmatpush1.xpose.msra.mxu0 0.0
    %650 = vmatprep.subr.mxu0 0.0
    %651 = vmatpush1.xpose.msra.mxu0 0.0
    %652 = vmatprep.subr.mxu0 0.0
    %653 = vmatpush1.xpose.msra.mxu0 0.0
    %654 = vmatprep.subr.mxu0 0.0
    %655 = vmatpush1.xpose.msra.mxu0 0.0
    %656 = vmatprep.subr.mxu0 0.0
    %657 = vmatpush1.xpose.msra.mxu0 0.0
    %658 = vmatprep.subr.mxu0 0.0
    %659 = vmatpush1.xpose.msra.mxu0 0.0
    %660 = vmatprep.subr.mxu0 0.0
    %661 = vmatpush1.xpose.msra.mxu0 0.0
    %662 = vmatprep.subr.mxu0 0.0
    %663 = vmatpush1.xpose.msra.mxu0 0.0
    %664 = vmatprep.subr.mxu0 0.0
    %665 = vmatpush1.xpose.msra.mxu0 0.0
    %666 = vmatprep.subr.mxu0 0.0
    %667 = vmatpush1.xpose.msra.mxu0 0.0
    %668 = vmatprep.subr.mxu0 0.0
    %669 = vmatpush1.xpose.msra.mxu0 0.0
    %670 = vmatprep.subr.mxu0 0.0
    %671 = vmatpush1.xpose.msra.mxu0 0.0
    %672 = vmatprep.subr.mxu0 0.0
    %673 = vmatpush1.xpose.msra.mxu0 0.0
    %674 = vmatprep.subr.mxu0 0.0
    %675 = vmatpush1.xpose.msra.mxu0 0.0
    %676 = vmatprep.subr.mxu0 0.0
    %677 = vmatpush1.xpose.msra.mxu0 0.0
    %678 = vmatprep.subr.mxu0 0.0
    %679 = vmatpush1.xpose.msra.mxu0 0.0
    %680 = vmatprep.subr.mxu0 0.0
    %681 = vmatpush1.xpose.msra.mxu0 0.0
    %682 = vmatprep.subr.mxu0 0.0
    %683 = vmatpush1.xpose.msra.mxu0 0.0
    %684 = vmatprep.subr.mxu0 0.0
    %685 = vmatpush1.xpose.msra.mxu0 0.0
    %686 = vmatprep.subr.mxu0 0.0
    %687 = vmatpush1.xpose.msra.mxu0 0.0
    %688 = vmatprep.subr.mxu0 0.0
    %689 = vmatpush1.xpose.msra.mxu0 0.0
    %690 = vmatprep.subr.mxu0 0.0
    %691 = vmatpush1.xpose.msra.mxu0 0.0
    %692 = vmatprep.subr.mxu0 0.0
    %693 = vmatpush1.xpose.msra.mxu0 0.0
    %694 = vmatprep.subr.mxu0 0.0
    %695 = vmatpush1.xpose.msra.mxu0 0.0
    %696 = vmatprep.mubr.f32.mxu0 0.0
    %697 = vmatmul.mubr.f32.gmra.mrb[0].mxu0 %v510
    %v698 = vpop.f32.mrb[0].mxu0
    %v699 = vadd.f32 %v506, %v698
    %v700 = vpop.f32.mrb[0].mxu0
    %701 = vdwg.mxu0
    %s702 = scalar_lea.vmem [#allocation2], 8
    %703 = vst.msk [vmem:[%s702] sm:$0xff] %vm606, %v699
    // Predicated region
    $region14: #{tpu_custom_call.1} parent=1 // pred_check
      _
    $region15: #{tpu_custom_call.1} parent=1 // pred_check_branch
      %705 = sbr.rel (0) target = $region17
    $region16: #{tpu_custom_call.1} parent=1 // pred_region
      %s707 = ssub.s32 256, 256
      %708 = vsyncadd [#allocation3], %s707
      %s709 = sshll.u32 [#allocation2], 4
      %s710 = int_to_ptr.vmem [resolvable:$true] %s709
      %715 = dma.vmem_to_hbm [thread:$0]  %s710, 256, %s3, [#allocation3], 128, 128, 8
    $region17: #{tpu_custom_call.1} parent=1 // pred_fallthru
      _
    // Predicated region
    $region18: #{tpu_custom_call.1} parent=1 // pred_check
      _
    $region19: #{tpu_custom_call.1} parent=1 // pred_check_branch
      %717 = sbr.rel (0) target = $region21
    $region20: #{tpu_custom_call.1} parent=1 // pred_region
      %718 = dma.done [#allocation3], 256
    $region21: #{tpu_custom_call.1} parent=1 // pred_fallthru
      _
    %719 = vsyncpa [#allocation3], 1

</llo_original>
